<compile_context>
chip_gen: v5e
topology: v5e:2x2
jax: 0.10.0
libtpu: 0.0.40
codegen_flags: <defaults>
</compile_context>

<pallas_src>
import functools

import jax
import jax.numpy as jnp
from jax import lax
from jax.experimental import pallas as pl
from jax.experimental.pallas import tpu as pltpu


def _if_encoder_kernel(x_ref, spikes_ref, *scratch, seq_tile, sub, dt_tau,
                       v_leak, v_th, v_reset, exact_recurrence):
    """x_ref: (row_tile, lane) f32.  spikes_ref: (seq_tile, row_tile, lane).
    scratch: optionally a (row_tile, lane) f32 membrane-potential carry (only
    present when seq_length spans more than one seq chunk)."""
    v_ref = scratch[0] if scratch else None
    multi_chunk = v_ref is not None
    row_tile = x_ref.shape[0]
    n_sub = row_tile // sub

    alpha = jnp.float32(1.0 - dt_tau)
    dt_tau_f = jnp.float32(dt_tau)
    v_leak_f = jnp.float32(v_leak)
    v_th_f = jnp.float32(v_th)
    v_reset_f = jnp.float32(v_reset)
    out_dtype = spikes_ref.dtype

    if multi_chunk:
        # New row block starts at the first seq chunk: reset the carried v.
        @pl.when(pl.program_id(1) == 0)
        def _():
            v_ref[...] = jnp.zeros_like(v_ref)

    # Fully unroll the in-vreg time loop for short seq chunks (gives the
    # scheduler room to pair the VALU ops with the per-step spike store);
    # partially unroll otherwise to bound code size.
    time_unroll = True if seq_tile <= 32 else 8

    @pl.loop(0, n_sub)
    def _(r):
        row = pl.multiple_of(r * sub, sub)
        x = x_ref[pl.ds(row, sub), :].astype(jnp.float32)

        if exact_recurrence:
            c = None
        elif v_leak == 0.0:
            c = dt_tau_f * x                      # skip "+ v_leak" (norse default)
        else:
            c = dt_tau_f * (x + v_leak_f)         # loop-invariant drive term

        v0 = v_ref[pl.ds(row, sub), :] if multi_chunk else jnp.zeros_like(x)

        def step(t, v):
            if exact_recurrence:
                # Original norse op ordering (bit-parity path).
                v = v + dt_tau_f * ((v_leak_f - v) + x)
                zb = v > v_th_f
                z = jnp.where(zb, 1.0, 0.0)
                spikes_ref[t, pl.ds(row, sub), :] = z.astype(out_dtype)
                v = v - z * (v - v_reset_f)
            else:
                v = alpha * v + c                 # == v + dt_tau*(v_leak - v + x)
                zb = v > v_th_f                   # heaviside(v - v_th)
                spikes_ref[t, pl.ds(row, sub), :] = (
                    jnp.where(zb, 1.0, 0.0).astype(out_dtype))
                v = jnp.where(zb, v_reset_f, v)   # v - z*(v - v_reset)
            return v

        v_final = lax.fori_loop(0, seq_tile, step, v0, unroll=time_unroll)
        if multi_chunk:
            v_ref[pl.ds(row, sub), :] = v_final


def _gen_budgets():
    """Generation-aware VMEM sizing: v5e/v6e have 128 MiB physical VMEM,
    v7x only 64 MiB per TensorCore."""
    try:
        cap = int(getattr(pltpu.get_tpu_info(), "vmem_capacity_bytes", 0)) or (64 << 20)
    except Exception:
        cap = 64 << 20                      # conservative: assume v7x-sized VMEM
    if cap >= (100 << 20):                  # v5e / v6e
        return {"out_block_bytes": 16 << 20,
                "vmem_limit_bytes": min(100 << 20, (cap * 3) // 4)}
    return {"out_block_bytes": 7 << 20,     # v7x: keep 2x out + 2x in + scratch small
            "vmem_limit_bytes": min(48 << 20, (cap * 3) // 4)}


def _choose_slab(total, sub):
    """Pick (lane, pad): lane-dense slab whose row count is a multiple of the
    output packed-sublane tile `sub`, preferring no padding and >= 2*sub rows
    (so the parallel row axis can have >= 2 blocks)."""
    lanes = (512, 256, 128) if sub <= 16 else (256, 128)
    for want in (2, 1):
        for lane in lanes:
            if total % lane == 0:
                rows = total // lane
                if rows % sub == 0 and rows >= want * sub:
                    return lane, 0
    lane = 128
    pad = (-total) % (sub * lane)
    return lane, pad


def _choose_row_tile(rows, lane, sub, max_block_elems=256 * 1024):
    """Largest multiple-of-sub divisor of rows keeping the f32 working block
    <= max_block_elems, preferring an even row-block count (balanced across
    the two v7x TensorCores) and some row parallelism."""
    cap = min(rows, max(sub, (max_block_elems // lane) // sub * sub))
    divisors = [r for r in range(sub, cap + 1, sub) if rows % r == 0]
    if not divisors:
        return rows

    def score(r):
        blocks = rows // r
        return (blocks % 2 == 0, min(blocks, 4), r)

    return max(divisors, key=score)


def _choose_seq_tile(seq_length, block_elems, out_bytes, max_block_bytes):
    """Largest divisor of seq_length keeping one output block <= budget."""
    cap = max(1, max_block_bytes // (block_elems * out_bytes))
    best = 1
    for s in range(1, min(seq_length, cap) + 1):
        if seq_length % s == 0:
            best = s
    return best


def if_constant_current_encode(x, seq_length, *, tau_mem_inv=1.0 / 0.01,
                               v_th=1.0, v_reset=0.0, v_leak=0.0, dt=0.001,
                               spike_dtype=jnp.bfloat16,
                               exact_recurrence=False):
    """Pallas implementation of IFConstantCurrentEncoder.forward.

    x: any-shape float array (e.g. NCHW).  Returns (seq_length, *x.shape)
    spikes (values are exactly 0/1).  spike_dtype defaults to bf16 for HBM
    writeback; pass jnp.float32 for torch dtype parity."""
    orig_shape = tuple(x.shape)
    x = x.astype(jnp.float32)
    total = int(x.size)
    seq_length = int(seq_length)

    out_bytes = jnp.dtype(spike_dtype).itemsize
    sub = max(8, 32 // out_bytes)           # packed sublane tile: f32 8, bf16 16, int8 32

    lane, pad = _choose_slab(total, sub)
    flat = x.reshape(-1)
    if pad:
        flat = jnp.pad(flat, (0, pad))
    rows = (total + pad) // lane
    slab = flat.reshape(rows, lane)

    budgets = _gen_budgets()
    row_tile = _choose_row_tile(rows, lane, sub)
    seq_tile = _choose_seq_tile(seq_length, row_tile * lane, out_bytes,
                                budgets["out_block_bytes"])
    n_seq_chunks = seq_length // seq_tile

    kernel = functools.partial(
        _if_encoder_kernel, seq_tile=seq_tile, sub=sub,
        dt_tau=float(dt) * float(tau_mem_inv), v_leak=float(v_leak),
        v_th=float(v_th), v_reset=float(v_reset),
        exact_recurrence=bool(exact_recurrence))

    # Membrane-potential carry scratch only needed when seq spans >1 chunk.
    scratch = ([pltpu.VMEM((row_tile, lane), jnp.float32)]
               if n_seq_chunks > 1 else [])

    spikes = pl.pallas_call(
        kernel,
        out_shape=jax.ShapeDtypeStruct((seq_length, rows, lane), spike_dtype),
        grid_spec=pltpu.PrefetchScalarGridSpec(
            num_scalar_prefetch=0,
            grid=(rows // row_tile, n_seq_chunks),
            in_specs=[pl.BlockSpec((row_tile, lane), lambda i, s: (i, 0))],
            out_specs=pl.BlockSpec((seq_tile, row_tile, lane),
                                   lambda i, s: (s, i, 0)),
            scratch_shapes=scratch,
        ),
        compiler_params=pltpu.CompilerParams(
            dimension_semantics=("parallel", "arbitrary"),
            vmem_limit_bytes=budgets["vmem_limit_bytes"],
        ),
    )(slab)

    spikes = spikes.reshape(seq_length, rows * lane)
    if pad:
        # TODO(synk): pad path costs one post-kernel slice copy; only taken
        # when `total` has no sub*128-friendly factorization.
        spikes = spikes[:, :total]
    return spikes.reshape((seq_length,) + orig_shape)


def _reference(x, seq_length, *, tau_mem_inv=1.0 / 0.01, v_th=1.0,
               v_reset=0.0, v_leak=0.0, dt=0.001, simplified=True):
    """Pure-JAX reference. simplified=True uses the same algebra as the
    default kernel path; False uses the original norse op ordering."""
    x = x.astype(jnp.float32)
    v = jnp.zeros_like(x)
    dt_tau = jnp.float32(dt * tau_mem_inv)
    alpha = jnp.float32(1.0 - dt * tau_mem_inv)
    outs = []
    for _ in range(seq_length):
        if simplified:
            v = alpha * v + dt_tau * (x + jnp.float32(v_leak))
        else:
            v = v + dt_tau * (jnp.float32(v_leak) - v + x)
        z = jnp.where(v > v_th, 1.0, 0.0).astype(jnp.float32)
        v = jnp.where(v > v_th, jnp.float32(v_reset), v)
        outs.append(z)
    return jnp.stack(outs, axis=0)


if __name__ == "__main__":
    key = jax.random.PRNGKey(0)
    B, C, H, W = 2, 4, 16, 16              # NCHW input, like a torch image batch
    seq_length = 8

    # Scale inputs so some neurons actually spike within seq_length steps.
    x = jax.random.uniform(key, (B, C, H, W), dtype=jnp.float32) * 20.0

    ref = _reference(x, seq_length, simplified=True)
    ref_orig = _reference(x, seq_length, simplified=False)

    # Default fast path: bf16 spikes, simplified recurrence.
    spikes = jax.block_until_ready(if_constant_current_encode(x, seq_length))
    assert spikes.shape == (seq_length, B, C, H, W)
    assert spikes.dtype == jnp.bfloat16
    sp32 = spikes.astype(jnp.float32)
    # Spikes are exactly 0/1; allow only a negligible fraction of boundary
    # flips (~1-ulp differences in v at exact threshold crossings).
    frac = float(jnp.mean(jnp.abs(sp32 - ref)))
    frac_orig = float(jnp.mean(jnp.abs(sp32 - ref_orig)))
    assert frac <= 1e-3, f"mismatch vs simplified reference: {frac}"
    assert frac_orig <= 1e-3, f"mismatch vs original-formula reference: {frac_orig}"

    # Torch-parity path: float32 spikes, original norse op ordering.
    spikes_f32 = jax.block_until_ready(
        if_constant_current_encode(x, seq_length, spike_dtype=jnp.float32,
                                   exact_recurrence=True))
    assert spikes_f32.shape == (seq_length, B, C, H, W)
    assert spikes_f32.dtype == jnp.float32
    frac_exact = float(jnp.mean(jnp.abs(spikes_f32 - ref_orig)))
    assert frac_exact <= 1e-3, f"mismatch (exact path) vs reference: {frac_exact}"

    print("KERNEL_OK")
</pallas_src>

<mosaic_0001>
module attributes {stable_mosaic.version = 11 : i64} {
  func.func @_if_encoder_kernel(%arg0: i32, %arg1: i32, %arg2: memref<16x128xf32, #tpu.memory_space<vmem>>, %arg3: memref<8x16x128xbf16, #tpu.memory_space<vmem>>) attributes {dimension_semantics = [#tpu.dimension_semantics<parallel>, #tpu.dimension_semantics<arbitrary>], iteration_bounds = array<i64: 1, 1>, scalar_prefetch = 0 : i64, scratch_operands = 0 : i64, tpu.core_type = #tpu.core_type<tc>, window_params = [{transform_indices = @transform_0, window_bounds = array<i64: 16, 128>}, {transform_indices = @transform_1, window_bounds = array<i64: 8, 16, 128>}]} {
    %cst = arith.constant 1.000000e-01 : f32
    %cst_0 = arith.constant 0.899999976 : f32
    %cst_1 = arith.constant 1.000000e+00 : f32
    %cst_2 = arith.constant 0.000000e+00 : f32
    %c0_i32 = arith.constant 0 : i32
    %c1_i32 = arith.constant 1 : i32
    %0 = arith.muli %c0_i32, %c1_i32 : i32
    %c0_i32_3 = arith.constant 0 : i32
    %1 = arith.addi %c0_i32_3, %0 : i32
    %c16_i32 = arith.constant 16 : i32
    %2 = arith.muli %1, %c16_i32 : i32
    %3 = tpu.assume_multiple %2, 16 : i32
    %4 = arith.index_cast %3 : i32 to index
    %c0 = arith.constant 0 : index
    %5 = vector.load %arg2[%4, %c0] : memref<16x128xf32, #tpu.memory_space<vmem>>, vector<16x128xf32>
    %6 = vector.broadcast %cst : f32 to vector<16x128xf32>
    %7 = arith.mulf %6, %5 : vector<16x128xf32>
    %cst_4 = arith.constant 0.000000e+00 : f32
    %8 = vector.broadcast %cst_4 : f32 to vector<16x128xf32>
    %c0_i32_5 = arith.constant 0 : i32
    %9 = vector.broadcast %cst_0 : f32 to vector<16x128xf32>
    %10 = arith.mulf %9, %8 : vector<16x128xf32>
    %11 = arith.addf %10, %7 : vector<16x128xf32>
    %12 = vector.broadcast %cst_1 : f32 to vector<16x128xf32>
    %13 = arith.cmpf ogt, %11, %12 : vector<16x128xf32>
    %cst_6 = arith.constant 1.000000e+00 : f32
    %cst_7 = arith.constant 0.000000e+00 : f32
    %14 = vector.broadcast %cst_6 : f32 to vector<16x128xf32>
    %15 = vector.broadcast %cst_7 : f32 to vector<16x128xf32>
    %16 = arith.select %13, %14, %15 : vector<16x128xi1>, vector<16x128xf32>
    %17 = arith.truncf %16 : vector<16x128xf32> to vector<16x128xbf16>
    %18 = arith.index_cast %c0_i32_5 : i32 to index
    %19 = arith.index_cast %3 : i32 to index
    %c0_8 = arith.constant 0 : index
    %20 = vector.load %arg3[%18, %19, %c0_8] : memref<8x16x128xbf16, #tpu.memory_space<vmem>>, vector<1x16x128xbf16>
    %21 = vector.shape_cast %20 : vector<1x16x128xbf16> to vector<16x128xbf16>
    %22 = vector.shape_cast %17 : vector<16x128xbf16> to vector<1x16x128xbf16>
    tpu.vector_store %arg3[%18, %19, %c0_8], %22 {strides = array<i32>} : memref<8x16x128xbf16, #tpu.memory_space<vmem>>, vector<1x16x128xbf16>,
    %23 = vector.broadcast %cst_2 : f32 to vector<16x128xf32>
    %24 = arith.select %13, %23, %11 : vector<16x128xi1>, vector<16x128xf32>
    %c1_i32_9 = arith.constant 1 : i32
    %25 = vector.broadcast %cst_0 : f32 to vector<16x128xf32>
    %26 = arith.mulf %25, %24 : vector<16x128xf32>
    %27 = arith.addf %26, %7 : vector<16x128xf32>
    %28 = vector.broadcast %cst_1 : f32 to vector<16x128xf32>
    %29 = arith.cmpf ogt, %27, %28 : vector<16x128xf32>
    %cst_10 = arith.constant 1.000000e+00 : f32
    %cst_11 = arith.constant 0.000000e+00 : f32
    %30 = vector.broadcast %cst_10 : f32 to vector<16x128xf32>
    %31 = vector.broadcast %cst_11 : f32 to vector<16x128xf32>
    %32 = arith.select %29, %30, %31 : vector<16x128xi1>, vector<16x128xf32>
    %33 = arith.truncf %32 : vector<16x128xf32> to vector<16x128xbf16>
    %34 = arith.index_cast %c1_i32_9 : i32 to index
    %35 = arith.index_cast %3 : i32 to index
    %c0_12 = arith.constant 0 : index
    %36 = vector.load %arg3[%34, %35, %c0_12] : memref<8x16x128xbf16, #tpu.memory_space<vmem>>, vector<1x16x128xbf16>
    %37 = vector.shape_cast %36 : vector<1x16x128xbf16> to vector<16x128xbf16>
    %38 = vector.shape_cast %33 : vector<16x128xbf16> to vector<1x16x128xbf16>
    tpu.vector_store %arg3[%34, %35, %c0_12], %38 {strides = array<i32>} : memref<8x16x128xbf16, #tpu.memory_space<vmem>>, vector<1x16x128xbf16>,
    %39 = vector.broadcast %cst_2 : f32 to vector<16x128xf32>
    %40 = arith.select %29, %39, %27 : vector<16x128xi1>, vector<16x128xf32>
    %c2_i32 = arith.constant 2 : i32
    %41 = vector.broadcast %cst_0 : f32 to vector<16x128xf32>
    %42 = arith.mulf %41, %40 : vector<16x128xf32>
    %43 = arith.addf %42, %7 : vector<16x128xf32>
    %44 = vector.broadcast %cst_1 : f32 to vector<16x128xf32>
    %45 = arith.cmpf ogt, %43, %44 : vector<16x128xf32>
    %cst_13 = arith.constant 1.000000e+00 : f32
    %cst_14 = arith.constant 0.000000e+00 : f32
    %46 = vector.broadcast %cst_13 : f32 to vector<16x128xf32>
    %47 = vector.broadcast %cst_14 : f32 to vector<16x128xf32>
    %48 = arith.select %45, %46, %47 : vector<16x128xi1>, vector<16x128xf32>
    %49 = arith.truncf %48 : vector<16x128xf32> to vector<16x128xbf16>
    %50 = arith.index_cast %c2_i32 : i32 to index
    %51 = arith.index_cast %3 : i32 to index
    %c0_15 = arith.constant 0 : index
    %52 = vector.load %arg3[%50, %51, %c0_15] : memref<8x16x128xbf16, #tpu.memory_space<vmem>>, vector<1x16x128xbf16>
    %53 = vector.shape_cast %52 : vector<1x16x128xbf16> to vector<16x128xbf16>
    %54 = vector.shape_cast %49 : vector<16x128xbf16> to vector<1x16x128xbf16>
    tpu.vector_store %arg3[%50, %51, %c0_15], %54 {strides = array<i32>} : memref<8x16x128xbf16, #tpu.memory_space<vmem>>, vector<1x16x128xbf16>,
    %55 = vector.broadcast %cst_2 : f32 to vector<16x128xf32>
    %56 = arith.select %45, %55, %43 : vector<16x128xi1>, vector<16x128xf32>
    %c3_i32 = arith.constant 3 : i32
    %57 = vector.broadcast %cst_0 : f32 to vector<16x128xf32>
    %58 = arith.mulf %57, %56 : vector<16x128xf32>
    %59 = arith.addf %58, %7 : vector<16x128xf32>
    %60 = vector.broadcast %cst_1 : f32 to vector<16x128xf32>
    %61 = arith.cmpf ogt, %59, %60 : vector<16x128xf32>
    %cst_16 = arith.constant 1.000000e+00 : f32
    %cst_17 = arith.constant 0.000000e+00 : f32
    %62 = vector.broadcast %cst_16 : f32 to vector<16x128xf32>
    %63 = vector.broadcast %cst_17 : f32 to vector<16x128xf32>
    %64 = arith.select %61, %62, %63 : vector<16x128xi1>, vector<16x128xf32>
    %65 = arith.truncf %64 : vector<16x128xf32> to vector<16x128xbf16>
    %66 = arith.index_cast %c3_i32 : i32 to index
    %67 = arith.index_cast %3 : i32 to index
    %c0_18 = arith.constant 0 : index
    %68 = vector.load %arg3[%66, %67, %c0_18] : memref<8x16x128xbf16, #tpu.memory_space<vmem>>, vector<1x16x128xbf16>
    %69 = vector.shape_cast %68 : vector<1x16x128xbf16> to vector<16x128xbf16>
    %70 = vector.shape_cast %65 : vector<16x128xbf16> to vector<1x16x128xbf16>
    tpu.vector_store %arg3[%66, %67, %c0_18], %70 {strides = array<i32>} : memref<8x16x128xbf16, #tpu.memory_space<vmem>>, vector<1x16x128xbf16>,
    %71 = vector.broadcast %cst_2 : f32 to vector<16x128xf32>
    %72 = arith.select %61, %71, %59 : vector<16x128xi1>, vector<16x128xf32>
    %c4_i32 = arith.constant 4 : i32
    %73 = vector.broadcast %cst_0 : f32 to vector<16x128xf32>
    %74 = arith.mulf %73, %72 : vector<16x128xf32>
    %75 = arith.addf %74, %7 : vector<16x128xf32>
    %76 = vector.broadcast %cst_1 : f32 to vector<16x128xf32>
    %77 = arith.cmpf ogt, %75, %76 : vector<16x128xf32>
    %cst_19 = arith.constant 1.000000e+00 : f32
    %cst_20 = arith.constant 0.000000e+00 : f32
    %78 = vector.broadcast %cst_19 : f32 to vector<16x128xf32>
    %79 = vector.broadcast %cst_20 : f32 to vector<16x128xf32>
    %80 = arith.select %77, %78, %79 : vector<16x128xi1>, vector<16x128xf32>
    %81 = arith.truncf %80 : vector<16x128xf32> to vector<16x128xbf16>
    %82 = arith.index_cast %c4_i32 : i32 to index
    %83 = arith.index_cast %3 : i32 to index
    %c0_21 = arith.constant 0 : index
    %84 = vector.load %arg3[%82, %83, %c0_21] : memref<8x16x128xbf16, #tpu.memory_space<vmem>>, vector<1x16x128xbf16>
    %85 = vector.shape_cast %84 : vector<1x16x128xbf16> to vector<16x128xbf16>
    %86 = vector.shape_cast %81 : vector<16x128xbf16> to vector<1x16x128xbf16>
    tpu.vector_store %arg3[%82, %83, %c0_21], %86 {strides = array<i32>} : memref<8x16x128xbf16, #tpu.memory_space<vmem>>, vector<1x16x128xbf16>,
    %87 = vector.broadcast %cst_2 : f32 to vector<16x128xf32>
    %88 = arith.select %77, %87, %75 : vector<16x128xi1>, vector<16x128xf32>
    %c5_i32 = arith.constant 5 : i32
    %89 = vector.broadcast %cst_0 : f32 to vector<16x128xf32>
    %90 = arith.mulf %89, %88 : vector<16x128xf32>
    %91 = arith.addf %90, %7 : vector<16x128xf32>
    %92 = vector.broadcast %cst_1 : f32 to vector<16x128xf32>
    %93 = arith.cmpf ogt, %91, %92 : vector<16x128xf32>
    %cst_22 = arith.constant 1.000000e+00 : f32
    %cst_23 = arith.constant 0.000000e+00 : f32
    %94 = vector.broadcast %cst_22 : f32 to vector<16x128xf32>
    %95 = vector.broadcast %cst_23 : f32 to vector<16x128xf32>
    %96 = arith.select %93, %94, %95 : vector<16x128xi1>, vector<16x128xf32>
    %97 = arith.truncf %96 : vector<16x128xf32> to vector<16x128xbf16>
    %98 = arith.index_cast %c5_i32 : i32 to index
    %99 = arith.index_cast %3 : i32 to index
    %c0_24 = arith.constant 0 : index
    %100 = vector.load %arg3[%98, %99, %c0_24] : memref<8x16x128xbf16, #tpu.memory_space<vmem>>, vector<1x16x128xbf16>
    %101 = vector.shape_cast %100 : vector<1x16x128xbf16> to vector<16x128xbf16>
    %102 = vector.shape_cast %97 : vector<16x128xbf16> to vector<1x16x128xbf16>
    tpu.vector_store %arg3[%98, %99, %c0_24], %102 {strides = array<i32>} : memref<8x16x128xbf16, #tpu.memory_space<vmem>>, vector<1x16x128xbf16>,
    %103 = vector.broadcast %cst_2 : f32 to vector<16x128xf32>
    %104 = arith.select %93, %103, %91 : vector<16x128xi1>, vector<16x128xf32>
    %c6_i32 = arith.constant 6 : i32
    %105 = vector.broadcast %cst_0 : f32 to vector<16x128xf32>
    %106 = arith.mulf %105, %104 : vector<16x128xf32>
    %107 = arith.addf %106, %7 : vector<16x128xf32>
    %108 = vector.broadcast %cst_1 : f32 to vector<16x128xf32>
    %109 = arith.cmpf ogt, %107, %108 : vector<16x128xf32>
    %cst_25 = arith.constant 1.000000e+00 : f32
    %cst_26 = arith.constant 0.000000e+00 : f32
    %110 = vector.broadcast %cst_25 : f32 to vector<16x128xf32>
    %111 = vector.broadcast %cst_26 : f32 to vector<16x128xf32>
    %112 = arith.select %109, %110, %111 : vector<16x128xi1>, vector<16x128xf32>
    %113 = arith.truncf %112 : vector<16x128xf32> to vector<16x128xbf16>
    %114 = arith.index_cast %c6_i32 : i32 to index
    %115 = arith.index_cast %3 : i32 to index
    %c0_27 = arith.constant 0 : index
    %116 = vector.load %arg3[%114, %115, %c0_27] : memref<8x16x128xbf16, #tpu.memory_space<vmem>>, vector<1x16x128xbf16>
    %117 = vector.shape_cast %116 : vector<1x16x128xbf16> to vector<16x128xbf16>
    %118 = vector.shape_cast %113 : vector<16x128xbf16> to vector<1x16x128xbf16>
    tpu.vector_store %arg3[%114, %115, %c0_27], %118 {strides = array<i32>} : memref<8x16x128xbf16, #tpu.memory_space<vmem>>, vector<1x16x128xbf16>,
    %119 = vector.broadcast %cst_2 : f32 to vector<16x128xf32>
    %120 = arith.select %109, %119, %107 : vector<16x128xi1>, vector<16x128xf32>
    %c7_i32 = arith.constant 7 : i32
    %121 = vector.broadcast %cst_0 : f32 to vector<16x128xf32>
    %122 = arith.mulf %121, %120 : vector<16x128xf32>
    %123 = arith.addf %122, %7 : vector<16x128xf32>
    %124 = vector.broadcast %cst_1 : f32 to vector<16x128xf32>
    %125 = arith.cmpf ogt, %123, %124 : vector<16x128xf32>
    %cst_28 = arith.constant 1.000000e+00 : f32
    %cst_29 = arith.constant 0.000000e+00 : f32
    %126 = vector.broadcast %cst_28 : f32 to vector<16x128xf32>
    %127 = vector.broadcast %cst_29 : f32 to vector<16x128xf32>
    %128 = arith.select %125, %126, %127 : vector<16x128xi1>, vector<16x128xf32>
    %129 = arith.truncf %128 : vector<16x128xf32> to vector<16x128xbf16>
    %130 = arith.index_cast %c7_i32 : i32 to index
    %131 = arith.index_cast %3 : i32 to index
    %c0_30 = arith.constant 0 : index
    %132 = vector.load %arg3[%130, %131, %c0_30] : memref<8x16x128xbf16, #tpu.memory_space<vmem>>, vector<1x16x128xbf16>
    %133 = vector.shape_cast %132 : vector<1x16x128xbf16> to vector<16x128xbf16>
    %134 = vector.shape_cast %129 : vector<16x128xbf16> to vector<1x16x128xbf16>
    tpu.vector_store %arg3[%130, %131, %c0_30], %134 {strides = array<i32>} : memref<8x16x128xbf16, #tpu.memory_space<vmem>>, vector<1x16x128xbf16>,
    %135 = vector.broadcast %cst_2 : f32 to vector<16x128xf32>
    %136 = arith.select %125, %135, %123 : vector<16x128xi1>, vector<16x128xf32>
    %c8_i32 = arith.constant 8 : i32
    %c1_i32_31 = arith.constant 1 : i32
    return
  }
  func.func @transform_0(%arg0: i32, %arg1: i32) -> (i32, i32) {
    %c0_i32 = arith.constant 0 : i32
    %c0_i32_0 = arith.constant 0 : i32
    return %arg0, %c0_i32 : i32, i32
  }
  func.func @transform_1(%arg0: i32, %arg1: i32) -> (i32, i32, i32) {
    %c0_i32 = arith.constant 0 : i32
    %c0_i32_0 = arith.constant 0 : i32
    return %arg1, %arg0, %c0_i32 : i32, i32, i32
  }
}

</mosaic_0001>

<llo_original>
// kernel: tpu_custom_call.1
$region0: #{tpu_custom_call.1}
  #allocation0 [shape = 'u32[]', space=smem, size = 0x4, offset = 0x4, fixed_abs, tag = 'smem constant byte address 0x4 - core index']
  #allocation1 [shape = 'u32[72,128]{1,0:T(1,128)}', space=vmem, size = 0x9000, scoped, tag = 'internal scratch']
  %s0 = inlined_call_operand.hbm [shape: f32[16,128], index: 0, kind: input, shape index: {}]
  %s1 = inlined_call_operand.hbm [shape: bf16[8,16,128], index: 1, kind: output, shape index: {}]
  %s2 = sld [smem:[#allocation0]]
  $region18: #{tpu_custom_call.1} parent=0
    _
  %s4 = ssub.s32 1, %s2
  %s5 = scalar_select 0, %s4, %s2
  $region1: #{tpu_custom_call.1} parent=0
    #allocation2 [shape = 'u8[8192]{0}', space=vmem, size = 0x2000, scoped, tag = 'input window, operand 0, single buffered']
    #allocation3 [shape = 's32[1]{0}', space=sflag, size = 0x4, scoped, tag = 'scoped memory for tpu_custom_call.1']
    #allocation4 [shape = 's32[1]{0}', space=sflag, size = 0x4, scoped, tag = 'scoped memory for tpu_custom_call.1']
    #allocation5 [shape = 'u8[32768]{0}', space=vmem, size = 0x8000, scoped, tag = 'output window, operand 0, single buffered']
    %6 = vsyncpa [#allocation3], 0
    %7 = vsyncpa [#allocation4], 0
    // Predicated region
    $region2: #{tpu_custom_call.1} parent=1 // pred_check
      _
    $region3: #{tpu_custom_call.1} parent=1 // pred_check_branch
      %9 = sbr.rel (0) target = $region5
    $region4: #{tpu_custom_call.1} parent=1 // pred_region
      %11 = vsyncadd [#allocation3], 0
      %s12 = sshll.u32 %s0, 4
      %s13 = int_to_ptr.hbm [resolvable:$true] %s12
      %s14 = sshll.u32 [#allocation2], 4
      %s15 = int_to_ptr.vmem [resolvable:$true] %s14
      %20 = dma.hbm_to_vmem [thread:$0]  %s13, 256, %s15, [#allocation3], 128, 128, 8
    $region5: #{tpu_custom_call.1} parent=1 // pred_fallthru
      _
    // Predicated region
    $region6: #{tpu_custom_call.1} parent=1 // pred_check
      _
    $region7: #{tpu_custom_call.1} parent=1 // pred_check_branch
      %22 = sbr.rel (0) target = $region9
    $region8: #{tpu_custom_call.1} parent=1 // pred_region
      %24 = dma.done [#allocation3], 256
    $region9: #{tpu_custom_call.1} parent=1 // pred_fallthru
      _
    %v25 = vld [vmem:[#allocation2] sm:$0xff]
    %v26 = vld [vmem:[#allocation2 + $0x8] sm:$0xff]
    %v27 = vmul.f32 %v25, 0.1
    %v28 = vmul.f32 %v26, 0.1
    %v29 = vadd.f32 %v27, 0.0
    %v30 = vadd.f32 %v28, 0.0
    %vm31 = vcmp.gt.f32.partialorder %v29, 1.0
    %vm32 = vcmp.gt.f32.partialorder %v30, 1.0
    %v33 = vsel %vm31, 1.0, 0.0
    %v34 = vsel %vm32, 1.0, 0.0
    %v35 = vpack.c.bf16 %v33, %v33
    %v36 = vpack.c.bf16 %v34, %v34
    %37 = vst [vmem:[#allocation5] sm:$0xf] %v35
    %38 = vst [vmem:[#allocation5 + $0x4] sm:$0xf] %v36
    %v39 = vsel %vm31, 0.0, %v29
    %v40 = vsel %vm32, 0.0, %v30
    %v41 = vmul.f32 %v39, 0.9
    %v42 = vmul.f32 %v40, 0.9
    %v43 = vadd.f32 %v41, %v27
    %v44 = vadd.f32 %v42, %v28
    %vm45 = vcmp.gt.f32.partialorder %v43, 1.0
    %vm46 = vcmp.gt.f32.partialorder %v44, 1.0
    %v47 = vsel %vm45, 1.0, 0.0
    %v48 = vsel %vm46, 1.0, 0.0
    %v49 = vpack.c.bf16 %v47, %v47
    %v50 = vpack.c.bf16 %v48, %v48
    %s51 = sadd.s32 0, 2
    %s52 = smul.addr %s51, 4
    %s53 = scalar_lea.vmem [#allocation5], %s52
    %54 = vst [vmem:[%s53] sm:$0xf] %v49
    %55 = vst [vmem:[%s53 + $0x4] sm:$0xf] %v50
    %v56 = vsel %vm45, 0.0, %v43
    %v57 = vsel %vm46, 0.0, %v44
    %v58 = vmul.f32 %v56, 0.9
    %v59 = vmul.f32 %v57, 0.9
    %v60 = vadd.f32 %v58, %v27
    %v61 = vadd.f32 %v59, %v28
    %vm62 = vcmp.gt.f32.partialorder %v60, 1.0
    %vm63 = vcmp.gt.f32.partialorder %v61, 1.0
    %v64 = vsel %vm62, 1.0, 0.0
    %v65 = vsel %vm63, 1.0, 0.0
    %v66 = vpack.c.bf16 %v64, %v64
    %v67 = vpack.c.bf16 %v65, %v65
    %s68 = sadd.s32 0, 4
    %s69 = smul.addr %s68, 4
    %s70 = scalar_lea.vmem [#allocation5], %s69
    %71 = vst [vmem:[%s70] sm:$0xf] %v66
    %72 = vst [vmem:[%s70 + $0x4] sm:$0xf] %v67
    %v73 = vsel %vm62, 0.0, %v60
    %v74 = vsel %vm63, 0.0, %v61
    %v75 = vmul.f32 %v73, 0.9
    %v76 = vmul.f32 %v74, 0.9
    %v77 = vadd.f32 %v75, %v27
    %v78 = vadd.f32 %v76, %v28
    %vm79 = vcmp.gt.f32.partialorder %v77, 1.0
    %vm80 = vcmp.gt.f32.partialorder %v78, 1.0
    %v81 = vsel %vm79, 1.0, 0.0
    %v82 = vsel %vm80, 1.0, 0.0
    %v83 = vpack.c.bf16 %v81, %v81
    %v84 = vpack.c.bf16 %v82, %v82
    %s85 = sadd.s32 0, 6
    %s86 = smul.addr %s85, 4
    %s87 = scalar_lea.vmem [#allocation5], %s86
    %88 = vst [vmem:[%s87] sm:$0xf] %v83
    %89 = vst [vmem:[%s87 + $0x4] sm:$0xf] %v84
    %v90 = vsel %vm79, 0.0, %v77
    %v91 = vsel %vm80, 0.0, %v78
    %v92 = vmul.f32 %v90, 0.9
    %v93 = vmul.f32 %v91, 0.9
    %v94 = vadd.f32 %v92, %v27
    %v95 = vadd.f32 %v93, %v28
    %vm96 = vcmp.gt.f32.partialorder %v94, 1.0
    %vm97 = vcmp.gt.f32.partialorder %v95, 1.0
    %v98 = vsel %vm96, 1.0, 0.0
    %v99 = vsel %vm97, 1.0, 0.0
    %v100 = vpack.c.bf16 %v98, %v98
    %v101 = vpack.c.bf16 %v99, %v99
    %s102 = sadd.s32 0, 8
    %s103 = smul.addr %s102, 4
    %s104 = scalar_lea.vmem [#allocation5], %s103
    %105 = vst [vmem:[%s104] sm:$0xf] %v100
    %106 = vst [vmem:[%s104 + $0x4] sm:$0xf] %v101
    %v107 = vsel %vm96, 0.0, %v94
    %v108 = vsel %vm97, 0.0, %v95
    %v109 = vmul.f32 %v107, 0.9
    %v110 = vmul.f32 %v108, 0.9
    %v111 = vadd.f32 %v109, %v27
    %v112 = vadd.f32 %v110, %v28
    %vm113 = vcmp.gt.f32.partialorder %v111, 1.0
    %vm114 = vcmp.gt.f32.partialorder %v112, 1.0
    %v115 = vsel %vm113, 1.0, 0.0
    %v116 = vsel %vm114, 1.0, 0.0
    %v117 = vpack.c.bf16 %v115, %v115
    %v118 = vpack.c.bf16 %v116, %v116
    %s119 = sadd.s32 0, 10
    %s120 = smul.addr %s119, 4
    %s121 = scalar_lea.vmem [#allocation5], %s120
    %122 = vst [vmem:[%s121] sm:$0xf] %v117
    %123 = vst [vmem:[%s121 + $0x4] sm:$0xf] %v118
    %v124 = vsel %vm113, 0.0, %v111
    %v125 = vsel %vm114, 0.0, %v112
    %v126 = vmul.f32 %v124, 0.9
    %v127 = vmul.f32 %v125, 0.9
    %v128 = vadd.f32 %v126, %v27
    %v129 = vadd.f32 %v127, %v28
    %vm130 = vcmp.gt.f32.partialorder %v128, 1.0
    %vm131 = vcmp.gt.f32.partialorder %v129, 1.0
    %v132 = vsel %vm130, 1.0, 0.0
    %v133 = vsel %vm131, 1.0, 0.0
    %v134 = vpack.c.bf16 %v132, %v132
    %v135 = vpack.c.bf16 %v133, %v133
    %s136 = sadd.s32 0, 12
    %s137 = smul.addr %s136, 4
    %s138 = scalar_lea.vmem [#allocation5], %s137
    %139 = vst [vmem:[%s138] sm:$0xf] %v134
    %140 = vst [vmem:[%s138 + $0x4] sm:$0xf] %v135
    %v141 = vsel %vm130, 0.0, %v128
    %v142 = vsel %vm131, 0.0, %v129
    %v143 = vmul.f32 %v141, 0.9
    %v144 = vmul.f32 %v142, 0.9
    %v145 = vadd.f32 %v143, %v27
    %v146 = vadd.f32 %v144, %v28
    %vm147 = vcmp.gt.f32.partialorder %v145, 1.0
    %vm148 = vcmp.gt.f32.partialorder %v146, 1.0
    %v149 = vsel %vm147, 1.0, 0.0
    %v150 = vsel %vm148, 1.0, 0.0
    %v151 = vpack.c.bf16 %v149, %v149
    %v152 = vpack.c.bf16 %v150, %v150
    %s153 = sadd.s32 0, 14
    %s154 = smul.addr %s153, 4
    %s155 = scalar_lea.vmem [#allocation5], %s154
    %156 = vst [vmem:[%s155] sm:$0xf] %v151
    %157 = vst [vmem:[%s155 + $0x4] sm:$0xf] %v152
    // Predicated region
    $region10: #{tpu_custom_call.1} parent=1 // pred_check
      _
    $region11: #{tpu_custom_call.1} parent=1 // pred_check_branch
      %159 = sbr.rel (0) target = $region13
    $region12: #{tpu_custom_call.1} parent=1 // pred_region
      %161 = vsyncadd [#allocation4], 0
      %s162 = sshll.u32 [#allocation5], 4
      %s163 = int_to_ptr.vmem [resolvable:$true] %s162
      %s164 = sshll.u32 %s1, 4
      %s165 = int_to_ptr.hbm [resolvable:$true] %s164
      %170 = dma.vmem_to_hbm [thread:$0]  %s163, 1024, %s165, [#allocation4], 64, 64, 4
    $region13: #{tpu_custom_call.1} parent=1 // pred_fallthru
      _
    // Predicated region
    $region14: #{tpu_custom_call.1} parent=1 // pred_check
      _
    $region15: #{tpu_custom_call.1} parent=1 // pred_check_branch
      %172 = sbr.rel (0) target = $region17
    $region16: #{tpu_custom_call.1} parent=1 // pred_region
      %174 = dma.done [#allocation4], 1024
    $region17: #{tpu_custom_call.1} parent=1 // pred_fallthru
      _
    %175 = vsyncpa [#allocation3], 1
    %176 = vsyncpa [#allocation4], 1

</llo_original>
